<compile_context>
chip_gen: v7x
topology: tpu7x:2x2x1
jax: 0.10.0
libtpu: 0.0.40
codegen_flags: <defaults>
</compile_context>

<pallas_src>
import math
import functools

import jax
import jax.numpy as jnp
from jax.experimental import pallas as pl
from jax.experimental.pallas import tpu as pltpu


def build_pe(d_model: int, max_len: int) -> jnp.ndarray:
    """JAX port of the torch build_pe (deterministic, no checkpoint)."""
    position = jnp.arange(max_len, dtype=jnp.float32)[:, None]               # (max_len, 1)
    div_term = jnp.exp(
        jnp.arange(0, d_model, 2, dtype=jnp.float32) * (-math.log(10000.0) / d_model)
    )                                                                         # (d_model/2,)
    pe = jnp.zeros((max_len, d_model), dtype=jnp.float32)
    pe = pe.at[:, 0::2].set(jnp.sin(position * div_term))
    pe = pe.at[:, 1::2].set(jnp.cos(position * div_term))
    return pe


def _make_gather_kernel(rows_per_step: int):
    assert rows_per_step % 8 == 0
    groups = rows_per_step // 8

    def kernel(idx_ref, pe_ref, out_ref):
        # idx_ref : SMEM (n_pad,) int32, scalar-prefetched flattened indices.
        # pe_ref  : VMEM (max_len, d_model) table; constant block index ->
        #           fetched from HBM once and kept resident across steps.
        # out_ref : VMEM (rows_per_step, d_model) output block for this step.
        base = pl.program_id(0) * rows_per_step
        for grp in range(groups):                     # static unroll
            start = grp * 8                           # static -> cheap ref view
            rows = [
                pe_ref[pl.ds(idx_ref[base + start + r], 1), :]   # VMEM row load
                for r in range(8)
            ]
            # One full-sublane (8, d_model) store per group: unmasked vst
            # (lane-dense when d_model is a multiple of 128).
            out_ref[start:start + 8, :] = jnp.concatenate(rows, axis=0)

    return kernel


@functools.partial(jax.jit, static_argnames=("max_rows_per_step",))
def positional_embedding(x: jnp.ndarray, pe: jnp.ndarray, *, max_rows_per_step: int = 256):
    """Pallas equivalent of PositionalEmbedding.forward: returns pe[x]."""
    max_len, d_model = pe.shape
    orig_shape = x.shape
    n = 1
    for s in orig_shape:
        n *= int(s)

    # torch pe[x] would raise on out-of-range indices; clamp so the dynamic
    # row reads stay in bounds.
    x_flat = jnp.clip(x.reshape(n).astype(jnp.int32), 0, max_len - 1)

    # Rows per grid step: big enough to amortize per-step overhead, but no
    # bigger than the (8-padded) row count so small inputs need one step and
    # (usually) no padding / no post-kernel slice.
    n_pad8 = int(pl.cdiv(max(n, 1), 8)) * 8
    rows_per_step = min(int(max_rows_per_step), n_pad8)
    rows_per_step = max(8, (rows_per_step // 8) * 8)

    n_pad = int(pl.cdiv(n, rows_per_step)) * rows_per_step
    if n_pad != n:
        # Padding rows gather row 0 and are sliced off after the kernel.
        x_flat = jnp.concatenate(
            [x_flat, jnp.zeros((n_pad - n,), dtype=jnp.int32)], axis=0
        )

    grid = (n_pad // rows_per_step,)

    # Raise the scoped-VMEM budget only if the resident table + double-buffered
    # output blocks need it (leave the default otherwise).
    # TODO(synk): for tables too large for VMEM (esp. v7x's 64 MiB), fall back
    # to memory_space=pl.ANY + manual make_async_copy row gather into out_ref.
    itemsize = jnp.dtype(pe.dtype).itemsize
    table_bytes = max_len * d_model * itemsize
    block_bytes = rows_per_step * d_model * itemsize
    needed = table_bytes + 4 * block_bytes + (1 << 20)
    cp_kwargs = dict(dimension_semantics=("parallel",))
    if needed > (32 << 20):
        cp_kwargs["vmem_limit_bytes"] = int(needed)
    compiler_params = pltpu.CompilerParams(**cp_kwargs)

    out = pl.pallas_call(
        _make_gather_kernel(rows_per_step),
        out_shape=jax.ShapeDtypeStruct((n_pad, d_model), pe.dtype),
        grid_spec=pltpu.PrefetchScalarGridSpec(
            num_scalar_prefetch=1,                      # x_flat -> SMEM
            grid=grid,
            # Whole table, constant block index -> fetched once, resident in VMEM.
            in_specs=[pl.BlockSpec((max_len, d_model), lambda g, idx_ref: (0, 0))],
            out_specs=pl.BlockSpec((rows_per_step, d_model), lambda g, idx_ref: (g, 0)),
        ),
        compiler_params=compiler_params,
    )(x_flat, pe)

    if n_pad != n:
        out = out[:n]
    return out.reshape(*orig_shape, d_model)


if __name__ == "__main__":
    max_len = 64
    d_model = 128          # multiple of 128 -> lane-dense output stores
    B, S = 2, 16

    key = jax.random.PRNGKey(0)
    x = jax.random.randint(key, (B, S), minval=0, maxval=max_len, dtype=jnp.int32)

    pe = build_pe(d_model=d_model, max_len=max_len)

    out = jax.block_until_ready(positional_embedding(x, pe))

    # reference: plain JAX gather (== torch pe[x])
    ref = jnp.take(pe, x, axis=0)
    assert out.shape == (B, S, d_model), out.shape
    assert jnp.allclose(out, ref, atol=1e-6), "mismatch vs reference gather"

    # ragged row count (exercises the padding + slice path: 5 rows -> 8)
    x2 = jax.random.randint(jax.random.PRNGKey(1), (5,), 0, max_len, dtype=jnp.int32)
    out2 = jax.block_until_ready(positional_embedding(x2, pe))
    ref2 = jnp.take(pe, x2, axis=0)
    assert out2.shape == (5, d_model), out2.shape
    assert jnp.allclose(out2, ref2, atol=1e-6), "mismatch vs reference gather (ragged)"

    # multi-step case (640 rows -> rows_per_step=256, grid=3, padded tail)
    x3 = jax.random.randint(jax.random.PRNGKey(2), (4, 160), 0, max_len, dtype=jnp.int32)
    out3 = jax.block_until_ready(positional_embedding(x3, pe))
    ref3 = jnp.take(pe, x3, axis=0)
    assert out3.shape == (4, 160, d_model), out3.shape
    assert jnp.allclose(out3, ref3, atol=1e-6), "mismatch vs reference gather (multi-step)"

    print("KERNEL_OK")
</pallas_src>

<mosaic_0001>
module attributes {stable_mosaic.version = 11 : i64} {
  func.func @kernel(%arg0: i32, %arg1: memref<32xi32, #tpu.memory_space<smem>>, %arg2: memref<64x128xf32, #tpu.memory_space<vmem>>, %arg3: memref<32x128xf32, #tpu.memory_space<vmem>>) attributes {dimension_semantics = [#tpu.dimension_semantics<parallel>], iteration_bounds = array<i64: 1>, scalar_prefetch = 1 : i64, scratch_operands = 0 : i64, tpu.core_type = #tpu.core_type<tc>, window_params = [{pipeline_mode = #tpu.pipeline_mode<synchronous>, transform_indices = @transform_0, window_bounds = array<i64: 64, 128>}, {transform_indices = @transform_1, window_bounds = array<i64: 32, 128>}]} {
    %c32_i32 = arith.constant 32 : i32
    %0 = arith.muli %arg0, %c32_i32 : i32
    %c0_i32 = arith.constant 0 : i32
    %1 = arith.addi %0, %c0_i32 : i32
    %c0_i32_0 = arith.constant 0 : i32
    %2 = arith.addi %1, %c0_i32_0 : i32
    %3 = arith.index_cast %2 : i32 to index
    %4 = memref.load %arg1[%3] : memref<32xi32, #tpu.memory_space<smem>>
    %5 = arith.index_cast %4 : i32 to index
    %c0 = arith.constant 0 : index
    %6 = vector.load %arg2[%5, %c0] : memref<64x128xf32, #tpu.memory_space<vmem>>, vector<1x128xf32>
    %c0_i32_1 = arith.constant 0 : i32
    %7 = arith.addi %0, %c0_i32_1 : i32
    %c1_i32 = arith.constant 1 : i32
    %8 = arith.addi %7, %c1_i32 : i32
    %9 = arith.index_cast %8 : i32 to index
    %10 = memref.load %arg1[%9] : memref<32xi32, #tpu.memory_space<smem>>
    %11 = arith.index_cast %10 : i32 to index
    %c0_2 = arith.constant 0 : index
    %12 = vector.load %arg2[%11, %c0_2] : memref<64x128xf32, #tpu.memory_space<vmem>>, vector<1x128xf32>
    %c0_i32_3 = arith.constant 0 : i32
    %13 = arith.addi %0, %c0_i32_3 : i32
    %c2_i32 = arith.constant 2 : i32
    %14 = arith.addi %13, %c2_i32 : i32
    %15 = arith.index_cast %14 : i32 to index
    %16 = memref.load %arg1[%15] : memref<32xi32, #tpu.memory_space<smem>>
    %17 = arith.index_cast %16 : i32 to index
    %c0_4 = arith.constant 0 : index
    %18 = vector.load %arg2[%17, %c0_4] : memref<64x128xf32, #tpu.memory_space<vmem>>, vector<1x128xf32>
    %c0_i32_5 = arith.constant 0 : i32
    %19 = arith.addi %0, %c0_i32_5 : i32
    %c3_i32 = arith.constant 3 : i32
    %20 = arith.addi %19, %c3_i32 : i32
    %21 = arith.index_cast %20 : i32 to index
    %22 = memref.load %arg1[%21] : memref<32xi32, #tpu.memory_space<smem>>
    %23 = arith.index_cast %22 : i32 to index
    %c0_6 = arith.constant 0 : index
    %24 = vector.load %arg2[%23, %c0_6] : memref<64x128xf32, #tpu.memory_space<vmem>>, vector<1x128xf32>
    %c0_i32_7 = arith.constant 0 : i32
    %25 = arith.addi %0, %c0_i32_7 : i32
    %c4_i32 = arith.constant 4 : i32
    %26 = arith.addi %25, %c4_i32 : i32
    %27 = arith.index_cast %26 : i32 to index
    %28 = memref.load %arg1[%27] : memref<32xi32, #tpu.memory_space<smem>>
    %29 = arith.index_cast %28 : i32 to index
    %c0_8 = arith.constant 0 : index
    %30 = vector.load %arg2[%29, %c0_8] : memref<64x128xf32, #tpu.memory_space<vmem>>, vector<1x128xf32>
    %c0_i32_9 = arith.constant 0 : i32
    %31 = arith.addi %0, %c0_i32_9 : i32
    %c5_i32 = arith.constant 5 : i32
    %32 = arith.addi %31, %c5_i32 : i32
    %33 = arith.index_cast %32 : i32 to index
    %34 = memref.load %arg1[%33] : memref<32xi32, #tpu.memory_space<smem>>
    %35 = arith.index_cast %34 : i32 to index
    %c0_10 = arith.constant 0 : index
    %36 = vector.load %arg2[%35, %c0_10] : memref<64x128xf32, #tpu.memory_space<vmem>>, vector<1x128xf32>
    %c0_i32_11 = arith.constant 0 : i32
    %37 = arith.addi %0, %c0_i32_11 : i32
    %c6_i32 = arith.constant 6 : i32
    %38 = arith.addi %37, %c6_i32 : i32
    %39 = arith.index_cast %38 : i32 to index
    %40 = memref.load %arg1[%39] : memref<32xi32, #tpu.memory_space<smem>>
    %41 = arith.index_cast %40 : i32 to index
    %c0_12 = arith.constant 0 : index
    %42 = vector.load %arg2[%41, %c0_12] : memref<64x128xf32, #tpu.memory_space<vmem>>, vector<1x128xf32>
    %c0_i32_13 = arith.constant 0 : i32
    %43 = arith.addi %0, %c0_i32_13 : i32
    %c7_i32 = arith.constant 7 : i32
    %44 = arith.addi %43, %c7_i32 : i32
    %45 = arith.index_cast %44 : i32 to index
    %46 = memref.load %arg1[%45] : memref<32xi32, #tpu.memory_space<smem>>
    %47 = arith.index_cast %46 : i32 to index
    %c0_14 = arith.constant 0 : index
    %48 = vector.load %arg2[%47, %c0_14] : memref<64x128xf32, #tpu.memory_space<vmem>>, vector<1x128xf32>
    %49 = tpu.concatenate %6, %12, %18, %24, %30, %36, %42, %48 in 0 : vector<1x128xf32>, vector<1x128xf32>, vector<1x128xf32>, vector<1x128xf32>, vector<1x128xf32>, vector<1x128xf32>, vector<1x128xf32>, vector<1x128xf32> -> vector<8x128xf32>
    %c0_15 = arith.constant 0 : index
    %c0_16 = arith.constant 0 : index
    %50 = vector.load %arg3[%c0_15, %c0_16] : memref<32x128xf32, #tpu.memory_space<vmem>>, vector<8x128xf32>
    tpu.vector_store %arg3[%c0_15, %c0_16], %49 {strides = array<i32>} : memref<32x128xf32, #tpu.memory_space<vmem>>, vector<8x128xf32>,
    %c8_i32 = arith.constant 8 : i32
    %51 = arith.addi %0, %c8_i32 : i32
    %c0_i32_17 = arith.constant 0 : i32
    %52 = arith.addi %51, %c0_i32_17 : i32
    %53 = arith.index_cast %52 : i32 to index
    %54 = memref.load %arg1[%53] : memref<32xi32, #tpu.memory_space<smem>>
    %55 = arith.index_cast %54 : i32 to index
    %c0_18 = arith.constant 0 : index
    %56 = vector.load %arg2[%55, %c0_18] : memref<64x128xf32, #tpu.memory_space<vmem>>, vector<1x128xf32>
    %c8_i32_19 = arith.constant 8 : i32
    %57 = arith.addi %0, %c8_i32_19 : i32
    %c1_i32_20 = arith.constant 1 : i32
    %58 = arith.addi %57, %c1_i32_20 : i32
    %59 = arith.index_cast %58 : i32 to index
    %60 = memref.load %arg1[%59] : memref<32xi32, #tpu.memory_space<smem>>
    %61 = arith.index_cast %60 : i32 to index
    %c0_21 = arith.constant 0 : index
    %62 = vector.load %arg2[%61, %c0_21] : memref<64x128xf32, #tpu.memory_space<vmem>>, vector<1x128xf32>
    %c8_i32_22 = arith.constant 8 : i32
    %63 = arith.addi %0, %c8_i32_22 : i32
    %c2_i32_23 = arith.constant 2 : i32
    %64 = arith.addi %63, %c2_i32_23 : i32
    %65 = arith.index_cast %64 : i32 to index
    %66 = memref.load %arg1[%65] : memref<32xi32, #tpu.memory_space<smem>>
    %67 = arith.index_cast %66 : i32 to index
    %c0_24 = arith.constant 0 : index
    %68 = vector.load %arg2[%67, %c0_24] : memref<64x128xf32, #tpu.memory_space<vmem>>, vector<1x128xf32>
    %c8_i32_25 = arith.constant 8 : i32
    %69 = arith.addi %0, %c8_i32_25 : i32
    %c3_i32_26 = arith.constant 3 : i32
    %70 = arith.addi %69, %c3_i32_26 : i32
    %71 = arith.index_cast %70 : i32 to index
    %72 = memref.load %arg1[%71] : memref<32xi32, #tpu.memory_space<smem>>
    %73 = arith.index_cast %72 : i32 to index
    %c0_27 = arith.constant 0 : index
    %74 = vector.load %arg2[%73, %c0_27] : memref<64x128xf32, #tpu.memory_space<vmem>>, vector<1x128xf32>
    %c8_i32_28 = arith.constant 8 : i32
    %75 = arith.addi %0, %c8_i32_28 : i32
    %c4_i32_29 = arith.constant 4 : i32
    %76 = arith.addi %75, %c4_i32_29 : i32
    %77 = arith.index_cast %76 : i32 to index
    %78 = memref.load %arg1[%77] : memref<32xi32, #tpu.memory_space<smem>>
    %79 = arith.index_cast %78 : i32 to index
    %c0_30 = arith.constant 0 : index
    %80 = vector.load %arg2[%79, %c0_30] : memref<64x128xf32, #tpu.memory_space<vmem>>, vector<1x128xf32>
    %c8_i32_31 = arith.constant 8 : i32
    %81 = arith.addi %0, %c8_i32_31 : i32
    %c5_i32_32 = arith.constant 5 : i32
    %82 = arith.addi %81, %c5_i32_32 : i32
    %83 = arith.index_cast %82 : i32 to index
    %84 = memref.load %arg1[%83] : memref<32xi32, #tpu.memory_space<smem>>
    %85 = arith.index_cast %84 : i32 to index
    %c0_33 = arith.constant 0 : index
    %86 = vector.load %arg2[%85, %c0_33] : memref<64x128xf32, #tpu.memory_space<vmem>>, vector<1x128xf32>
    %c8_i32_34 = arith.constant 8 : i32
    %87 = arith.addi %0, %c8_i32_34 : i32
    %c6_i32_35 = arith.constant 6 : i32
    %88 = arith.addi %87, %c6_i32_35 : i32
    %89 = arith.index_cast %88 : i32 to index
    %90 = memref.load %arg1[%89] : memref<32xi32, #tpu.memory_space<smem>>
    %91 = arith.index_cast %90 : i32 to index
    %c0_36 = arith.constant 0 : index
    %92 = vector.load %arg2[%91, %c0_36] : memref<64x128xf32, #tpu.memory_space<vmem>>, vector<1x128xf32>
    %c8_i32_37 = arith.constant 8 : i32
    %93 = arith.addi %0, %c8_i32_37 : i32
    %c7_i32_38 = arith.constant 7 : i32
    %94 = arith.addi %93, %c7_i32_38 : i32
    %95 = arith.index_cast %94 : i32 to index
    %96 = memref.load %arg1[%95] : memref<32xi32, #tpu.memory_space<smem>>
    %97 = arith.index_cast %96 : i32 to index
    %c0_39 = arith.constant 0 : index
    %98 = vector.load %arg2[%97, %c0_39] : memref<64x128xf32, #tpu.memory_space<vmem>>, vector<1x128xf32>
    %99 = tpu.concatenate %56, %62, %68, %74, %80, %86, %92, %98 in 0 : vector<1x128xf32>, vector<1x128xf32>, vector<1x128xf32>, vector<1x128xf32>, vector<1x128xf32>, vector<1x128xf32>, vector<1x128xf32>, vector<1x128xf32> -> vector<8x128xf32>
    %c8 = arith.constant 8 : index
    %c0_40 = arith.constant 0 : index
    %100 = vector.load %arg3[%c8, %c0_40] : memref<32x128xf32, #tpu.memory_space<vmem>>, vector<8x128xf32>
    tpu.vector_store %arg3[%c8, %c0_40], %99 {strides = array<i32>} : memref<32x128xf32, #tpu.memory_space<vmem>>, vector<8x128xf32>,
    %c16_i32 = arith.constant 16 : i32
    %101 = arith.addi %0, %c16_i32 : i32
    %c0_i32_41 = arith.constant 0 : i32
    %102 = arith.addi %101, %c0_i32_41 : i32
    %103 = arith.index_cast %102 : i32 to index
    %104 = memref.load %arg1[%103] : memref<32xi32, #tpu.memory_space<smem>>
    %105 = arith.index_cast %104 : i32 to index
    %c0_42 = arith.constant 0 : index
    %106 = vector.load %arg2[%105, %c0_42] : memref<64x128xf32, #tpu.memory_space<vmem>>, vector<1x128xf32>
    %c16_i32_43 = arith.constant 16 : i32
    %107 = arith.addi %0, %c16_i32_43 : i32
    %c1_i32_44 = arith.constant 1 : i32
    %108 = arith.addi %107, %c1_i32_44 : i32
    %109 = arith.index_cast %108 : i32 to index
    %110 = memref.load %arg1[%109] : memref<32xi32, #tpu.memory_space<smem>>
    %111 = arith.index_cast %110 : i32 to index
    %c0_45 = arith.constant 0 : index
    %112 = vector.load %arg2[%111, %c0_45] : memref<64x128xf32, #tpu.memory_space<vmem>>, vector<1x128xf32>
    %c16_i32_46 = arith.constant 16 : i32
    %113 = arith.addi %0, %c16_i32_46 : i32
    %c2_i32_47 = arith.constant 2 : i32
    %114 = arith.addi %113, %c2_i32_47 : i32
    %115 = arith.index_cast %114 : i32 to index
    %116 = memref.load %arg1[%115] : memref<32xi32, #tpu.memory_space<smem>>
    %117 = arith.index_cast %116 : i32 to index
    %c0_48 = arith.constant 0 : index
    %118 = vector.load %arg2[%117, %c0_48] : memref<64x128xf32, #tpu.memory_space<vmem>>, vector<1x128xf32>
    %c16_i32_49 = arith.constant 16 : i32
    %119 = arith.addi %0, %c16_i32_49 : i32
    %c3_i32_50 = arith.constant 3 : i32
    %120 = arith.addi %119, %c3_i32_50 : i32
    %121 = arith.index_cast %120 : i32 to index
    %122 = memref.load %arg1[%121] : memref<32xi32, #tpu.memory_space<smem>>
    %123 = arith.index_cast %122 : i32 to index
    %c0_51 = arith.constant 0 : index
    %124 = vector.load %arg2[%123, %c0_51] : memref<64x128xf32, #tpu.memory_space<vmem>>, vector<1x128xf32>
    %c16_i32_52 = arith.constant 16 : i32
    %125 = arith.addi %0, %c16_i32_52 : i32
    %c4_i32_53 = arith.constant 4 : i32
    %126 = arith.addi %125, %c4_i32_53 : i32
    %127 = arith.index_cast %126 : i32 to index
    %128 = memref.load %arg1[%127] : memref<32xi32, #tpu.memory_space<smem>>
    %129 = arith.index_cast %128 : i32 to index
    %c0_54 = arith.constant 0 : index
    %130 = vector.load %arg2[%129, %c0_54] : memref<64x128xf32, #tpu.memory_space<vmem>>, vector<1x128xf32>
    %c16_i32_55 = arith.constant 16 : i32
    %131 = arith.addi %0, %c16_i32_55 : i32
    %c5_i32_56 = arith.constant 5 : i32
    %132 = arith.addi %131, %c5_i32_56 : i32
    %133 = arith.index_cast %132 : i32 to index
    %134 = memref.load %arg1[%133] : memref<32xi32, #tpu.memory_space<smem>>
    %135 = arith.index_cast %134 : i32 to index
    %c0_57 = arith.constant 0 : index
    %136 = vector.load %arg2[%135, %c0_57] : memref<64x128xf32, #tpu.memory_space<vmem>>, vector<1x128xf32>
    %c16_i32_58 = arith.constant 16 : i32
    %137 = arith.addi %0, %c16_i32_58 : i32
    %c6_i32_59 = arith.constant 6 : i32
    %138 = arith.addi %137, %c6_i32_59 : i32
    %139 = arith.index_cast %138 : i32 to index
    %140 = memref.load %arg1[%139] : memref<32xi32, #tpu.memory_space<smem>>
    %141 = arith.index_cast %140 : i32 to index
    %c0_60 = arith.constant 0 : index
    %142 = vector.load %arg2[%141, %c0_60] : memref<64x128xf32, #tpu.memory_space<vmem>>, vector<1x128xf32>
    %c16_i32_61 = arith.constant 16 : i32
    %143 = arith.addi %0, %c16_i32_61 : i32
    %c7_i32_62 = arith.constant 7 : i32
    %144 = arith.addi %143, %c7_i32_62 : i32
    %145 = arith.index_cast %144 : i32 to index
    %146 = memref.load %arg1[%145] : memref<32xi32, #tpu.memory_space<smem>>
    %147 = arith.index_cast %146 : i32 to index
    %c0_63 = arith.constant 0 : index
    %148 = vector.load %arg2[%147, %c0_63] : memref<64x128xf32, #tpu.memory_space<vmem>>, vector<1x128xf32>
    %149 = tpu.concatenate %106, %112, %118, %124, %130, %136, %142, %148 in 0 : vector<1x128xf32>, vector<1x128xf32>, vector<1x128xf32>, vector<1x128xf32>, vector<1x128xf32>, vector<1x128xf32>, vector<1x128xf32>, vector<1x128xf32> -> vector<8x128xf32>
    %c16 = arith.constant 16 : index
    %c0_64 = arith.constant 0 : index
    %150 = vector.load %arg3[%c16, %c0_64] : memref<32x128xf32, #tpu.memory_space<vmem>>, vector<8x128xf32>
    tpu.vector_store %arg3[%c16, %c0_64], %149 {strides = array<i32>} : memref<32x128xf32, #tpu.memory_space<vmem>>, vector<8x128xf32>,
    %c24_i32 = arith.constant 24 : i32
    %151 = arith.addi %0, %c24_i32 : i32
    %c0_i32_65 = arith.constant 0 : i32
    %152 = arith.addi %151, %c0_i32_65 : i32
    %153 = arith.index_cast %152 : i32 to index
    %154 = memref.load %arg1[%153] : memref<32xi32, #tpu.memory_space<smem>>
    %155 = arith.index_cast %154 : i32 to index
    %c0_66 = arith.constant 0 : index
    %156 = vector.load %arg2[%155, %c0_66] : memref<64x128xf32, #tpu.memory_space<vmem>>, vector<1x128xf32>
    %c24_i32_67 = arith.constant 24 : i32
    %157 = arith.addi %0, %c24_i32_67 : i32
    %c1_i32_68 = arith.constant 1 : i32
    %158 = arith.addi %157, %c1_i32_68 : i32
    %159 = arith.index_cast %158 : i32 to index
    %160 = memref.load %arg1[%159] : memref<32xi32, #tpu.memory_space<smem>>
    %161 = arith.index_cast %160 : i32 to index
    %c0_69 = arith.constant 0 : index
    %162 = vector.load %arg2[%161, %c0_69] : memref<64x128xf32, #tpu.memory_space<vmem>>, vector<1x128xf32>
    %c24_i32_70 = arith.constant 24 : i32
    %163 = arith.addi %0, %c24_i32_70 : i32
    %c2_i32_71 = arith.constant 2 : i32
    %164 = arith.addi %163, %c2_i32_71 : i32
    %165 = arith.index_cast %164 : i32 to index
    %166 = memref.load %arg1[%165] : memref<32xi32, #tpu.memory_space<smem>>
    %167 = arith.index_cast %166 : i32 to index
    %c0_72 = arith.constant 0 : index
    %168 = vector.load %arg2[%167, %c0_72] : memref<64x128xf32, #tpu.memory_space<vmem>>, vector<1x128xf32>
    %c24_i32_73 = arith.constant 24 : i32
    %169 = arith.addi %0, %c24_i32_73 : i32
    %c3_i32_74 = arith.constant 3 : i32
    %170 = arith.addi %169, %c3_i32_74 : i32
    %171 = arith.index_cast %170 : i32 to index
    %172 = memref.load %arg1[%171] : memref<32xi32, #tpu.memory_space<smem>>
    %173 = arith.index_cast %172 : i32 to index
    %c0_75 = arith.constant 0 : index
    %174 = vector.load %arg2[%173, %c0_75] : memref<64x128xf32, #tpu.memory_space<vmem>>, vector<1x128xf32>
    %c24_i32_76 = arith.constant 24 : i32
    %175 = arith.addi %0, %c24_i32_76 : i32
    %c4_i32_77 = arith.constant 4 : i32
    %176 = arith.addi %175, %c4_i32_77 : i32
    %177 = arith.index_cast %176 : i32 to index
    %178 = memref.load %arg1[%177] : memref<32xi32, #tpu.memory_space<smem>>
    %179 = arith.index_cast %178 : i32 to index
    %c0_78 = arith.constant 0 : index
    %180 = vector.load %arg2[%179, %c0_78] : memref<64x128xf32, #tpu.memory_space<vmem>>, vector<1x128xf32>
    %c24_i32_79 = arith.constant 24 : i32
    %181 = arith.addi %0, %c24_i32_79 : i32
    %c5_i32_80 = arith.constant 5 : i32
    %182 = arith.addi %181, %c5_i32_80 : i32
    %183 = arith.index_cast %182 : i32 to index
    %184 = memref.load %arg1[%183] : memref<32xi32, #tpu.memory_space<smem>>
    %185 = arith.index_cast %184 : i32 to index
    %c0_81 = arith.constant 0 : index
    %186 = vector.load %arg2[%185, %c0_81] : memref<64x128xf32, #tpu.memory_space<vmem>>, vector<1x128xf32>
    %c24_i32_82 = arith.constant 24 : i32
    %187 = arith.addi %0, %c24_i32_82 : i32
    %c6_i32_83 = arith.constant 6 : i32
    %188 = arith.addi %187, %c6_i32_83 : i32
    %189 = arith.index_cast %188 : i32 to index
    %190 = memref.load %arg1[%189] : memref<32xi32, #tpu.memory_space<smem>>
    %191 = arith.index_cast %190 : i32 to index
    %c0_84 = arith.constant 0 : index
    %192 = vector.load %arg2[%191, %c0_84] : memref<64x128xf32, #tpu.memory_space<vmem>>, vector<1x128xf32>
    %c24_i32_85 = arith.constant 24 : i32
    %193 = arith.addi %0, %c24_i32_85 : i32
    %c7_i32_86 = arith.constant 7 : i32
    %194 = arith.addi %193, %c7_i32_86 : i32
    %195 = arith.index_cast %194 : i32 to index
    %196 = memref.load %arg1[%195] : memref<32xi32, #tpu.memory_space<smem>>
    %197 = arith.index_cast %196 : i32 to index
    %c0_87 = arith.constant 0 : index
    %198 = vector.load %arg2[%197, %c0_87] : memref<64x128xf32, #tpu.memory_space<vmem>>, vector<1x128xf32>
    %199 = tpu.concatenate %156, %162, %168, %174, %180, %186, %192, %198 in 0 : vector<1x128xf32>, vector<1x128xf32>, vector<1x128xf32>, vector<1x128xf32>, vector<1x128xf32>, vector<1x128xf32>, vector<1x128xf32>, vector<1x128xf32> -> vector<8x128xf32>
    %c24 = arith.constant 24 : index
    %c0_88 = arith.constant 0 : index
    %200 = vector.load %arg3[%c24, %c0_88] : memref<32x128xf32, #tpu.memory_space<vmem>>, vector<8x128xf32>
    tpu.vector_store %arg3[%c24, %c0_88], %199 {strides = array<i32>} : memref<32x128xf32, #tpu.memory_space<vmem>>, vector<8x128xf32>,
    return
  }
  func.func @transform_0(%arg0: i32, %arg1: memref<32xi32, #tpu.memory_space<smem>>) -> (i32, i32) {
    %c0_i32 = arith.constant 0 : i32
    %c0_i32_0 = arith.constant 0 : i32
    %c0_i32_1 = arith.constant 0 : i32
    return %c0_i32, %c0_i32_0 : i32, i32
  }
  func.func @transform_1(%arg0: i32, %arg1: memref<32xi32, #tpu.memory_space<smem>>) -> (i32, i32) {
    %c0_i32 = arith.constant 0 : i32
    %c0_i32_0 = arith.constant 0 : i32
    return %arg0, %c0_i32 : i32, i32
  }
}

</mosaic_0001>

<llo_original>
// kernel: positional_embedding.1
$region0: #{positional_embedding.1}
  #allocation0 [shape = 'u32[]', space=smem, size = 0x4, offset = 0x4, fixed_abs, tag = 'smem constant byte address 0x4 - core index']
  #allocation1 [shape = 'u32[144,128]{1,0:T(1,128)}', space=vmem, size = 0x12000, scoped, tag = 'internal scratch']
  #allocation2 [shape = 's32[1]{0}', space=sflag, size = 0x4, scoped, tag = 'scoped memory for positional_embedding.1']
  #allocation3 [shape = 'u8[512]{0}', space=smem, size = 0x200, scoped, tag = 'prefetched SMEM operand 0']
  %s0 = inlined_call_operand.vmem [shape: s32[32], index: 0, kind: input, shape index: {}]
  %s1 = inlined_call_operand.hbm [shape: f32[64,128], index: 1, kind: input, shape index: {}]
  %s2 = inlined_call_operand.hbm [shape: f32[32,128], index: 2, kind: output, shape index: {}]
  %s3 = sld [smem:[#allocation0]]
  $region18: #{positional_embedding.1} parent=0
    _
  %s5 = ssub.s32 1, %s3
  %s6 = scalar_select 0, %s5, %s3
  %s7 = sshll.u32 %s0, 4
  %s8 = int_to_ptr.vmem [resolvable:$true] %s7
  %10 = dma.vmem_to_smem %s8, 16, [#allocation3], [#allocation2]
  %11 = dma.done [#allocation2], 16
  %12 = sfence
  $region1: #{positional_embedding.1} parent=0
    #allocation4 [shape = 'u8[32768]{0}', space=vmem, size = 0x8000, scoped, tag = 'input window, operand 1, single buffered']
    #allocation5 [shape = 's32[1]{0}', space=sflag, size = 0x4, scoped, tag = 'scoped memory for positional_embedding.1']
    #allocation6 [shape = 's32[1]{0}', space=sflag, size = 0x4, scoped, tag = 'scoped memory for positional_embedding.1']
    #allocation7 [shape = 'u8[16384]{0}', space=vmem, size = 0x4000, scoped, tag = 'output window, operand 0, single buffered']
    %13 = vsyncpa [#allocation5], 0
    %14 = vsyncpa [#allocation6], 0
    // Predicated region
    $region2: #{positional_embedding.1} parent=1 // pred_check
      _
    $region3: #{positional_embedding.1} parent=1 // pred_check_branch
      %16 = sbr.rel (0) target = $region5
    $region4: #{positional_embedding.1} parent=1 // pred_region
      %s18 = ssub.s32 1024, 1024
      %19 = vsyncadd [#allocation5], %s18
      %s20 = sshll.u32 [#allocation4], 4
      %s21 = int_to_ptr.vmem [resolvable:$true] %s20
      %26 = dma.hbm_to_vmem [thread:$0]  %s1, 1024, %s21, [#allocation5], 128, 128, 8
    $region5: #{positional_embedding.1} parent=1 // pred_fallthru
      _
    // Predicated region
    $region6: #{positional_embedding.1} parent=1 // pred_check
      _
    $region7: #{positional_embedding.1} parent=1 // pred_check_branch
      %28 = sbr.rel (0) target = $region9
    $region8: #{positional_embedding.1} parent=1 // pred_region
      %29 = dma.done [#allocation5], 1024
    $region9: #{positional_embedding.1} parent=1 // pred_fallthru
      _
    %s30 = smul.u32 0, 32
    %s31 = sld [smem:[#allocation3 + %s30]]
    %s32 = scalar_lea.vmem [#allocation4], %s31
    %v33 = vld [vmem:[%s32] sm:$0x1]
    %s34 = sadd.s32 %s30, 1
    %s35 = sld [smem:[#allocation3 + %s34]]
    %s36 = scalar_lea.vmem [#allocation4], %s35
    %v37 = vld [vmem:[%s36] sm:$0x1]
    %s38 = sadd.s32 %s30, 2
    %s39 = sld [smem:[#allocation3 + %s38]]
    %s40 = scalar_lea.vmem [#allocation4], %s39
    %v41 = vld [vmem:[%s40] sm:$0x1]
    %s42 = sadd.s32 %s30, 3
    %s43 = sld [smem:[#allocation3 + %s42]]
    %s44 = scalar_lea.vmem [#allocation4], %s43
    %v45 = vld [vmem:[%s44] sm:$0x1]
    %s46 = sadd.s32 %s30, 4
    %s47 = sld [smem:[#allocation3 + %s46]]
    %s48 = scalar_lea.vmem [#allocation4], %s47
    %v49 = vld [vmem:[%s48] sm:$0x1]
    %s50 = sadd.s32 %s30, 5
    %s51 = sld [smem:[#allocation3 + %s50]]
    %s52 = scalar_lea.vmem [#allocation4], %s51
    %v53 = vld [vmem:[%s52] sm:$0x1]
    %s54 = sadd.s32 %s30, 6
    %s55 = sld [smem:[#allocation3 + %s54]]
    %s56 = scalar_lea.vmem [#allocation4], %s55
    %v57 = vld [vmem:[%s56] sm:$0x1]
    %s58 = sadd.s32 %s30, 7
    %s59 = sld [smem:[#allocation3 + %s58]]
    %s60 = scalar_lea.vmem [#allocation4], %s59
    %v61 = vld [vmem:[%s60] sm:$0x1]
    %v63 = vrot.slane %v37, 7
    %v66 = vrot.slane %v41, 6
    %v69 = vrot.slane %v45, 5
    %v72 = vrot.slane %v49, 4
    %v75 = vrot.slane %v53, 3
    %v78 = vrot.slane %v57, 2
    %v81 = vrot.slane %v61, 1
    %vm83 = vcmask 1040384
    %v84 = vsel %vm83, %v33, %v63
    %vm85 = vcmask 1041408
    %v86 = vsel %vm85, %v84, %v66
    %vm87 = vcmask 1042432
    %v88 = vsel %vm87, %v86, %v69
    %vm89 = vcmask 1043456
    %v90 = vsel %vm89, %v88, %v72
    %vm91 = vcmask 1044480
    %v92 = vsel %vm91, %v90, %v75
    %vm93 = vcmask 1045504
    %v94 = vsel %vm93, %v92, %v78
    %vm95 = vcmask 1046528
    %v96 = vsel %vm95, %v94, %v81
    %97 = vst [vmem:[#allocation7] sm:$0xff] %v96
    %s98 = sadd.s32 %s30, 8
    %s99 = sld [smem:[#allocation3 + %s98]]
    %s100 = scalar_lea.vmem [#allocation4], %s99
    %v101 = vld [vmem:[%s100] sm:$0x1]
    %s102 = sadd.s32 %s30, 9
    %s103 = sld [smem:[#allocation3 + %s102]]
    %s104 = scalar_lea.vmem [#allocation4], %s103
    %v105 = vld [vmem:[%s104] sm:$0x1]
    %s106 = sadd.s32 %s30, 10
    %s107 = sld [smem:[#allocation3 + %s106]]
    %s108 = scalar_lea.vmem [#allocation4], %s107
    %v109 = vld [vmem:[%s108] sm:$0x1]
    %s110 = sadd.s32 %s30, 11
    %s111 = sld [smem:[#allocation3 + %s110]]
    %s112 = scalar_lea.vmem [#allocation4], %s111
    %v113 = vld [vmem:[%s112] sm:$0x1]
    %s114 = sadd.s32 %s30, 12
    %s115 = sld [smem:[#allocation3 + %s114]]
    %s116 = scalar_lea.vmem [#allocation4], %s115
    %v117 = vld [vmem:[%s116] sm:$0x1]
    %s118 = sadd.s32 %s30, 13
    %s119 = sld [smem:[#allocation3 + %s118]]
    %s120 = scalar_lea.vmem [#allocation4], %s119
    %v121 = vld [vmem:[%s120] sm:$0x1]
    %s122 = sadd.s32 %s30, 14
    %s123 = sld [smem:[#allocation3 + %s122]]
    %s124 = scalar_lea.vmem [#allocation4], %s123
    %v125 = vld [vmem:[%s124] sm:$0x1]
    %s126 = sadd.s32 %s30, 15
    %s127 = sld [smem:[#allocation3 + %s126]]
    %s128 = scalar_lea.vmem [#allocation4], %s127
    %v129 = vld [vmem:[%s128] sm:$0x1]
    %v131 = vrot.slane %v105, 7
    %v134 = vrot.slane %v109, 6
    %v137 = vrot.slane %v113, 5
    %v140 = vrot.slane %v117, 4
    %v143 = vrot.slane %v121, 3
    %v146 = vrot.slane %v125, 2
    %v149 = vrot.slane %v129, 1
    %v151 = vsel %vm83, %v101, %v131
    %v152 = vsel %vm85, %v151, %v134
    %v153 = vsel %vm87, %v152, %v137
    %v154 = vsel %vm89, %v153, %v140
    %v155 = vsel %vm91, %v154, %v143
    %v156 = vsel %vm93, %v155, %v146
    %v157 = vsel %vm95, %v156, %v149
    %158 = vst [vmem:[#allocation7 + $0x8] sm:$0xff] %v157
    %s159 = sadd.s32 %s30, 16
    %s160 = sld [smem:[#allocation3 + %s159]]
    %s161 = scalar_lea.vmem [#allocation4], %s160
    %v162 = vld [vmem:[%s161] sm:$0x1]
    %s163 = sadd.s32 %s30, 17
    %s164 = sld [smem:[#allocation3 + %s163]]
    %s165 = scalar_lea.vmem [#allocation4], %s164
    %v166 = vld [vmem:[%s165] sm:$0x1]
    %s167 = sadd.s32 %s30, 18
    %s168 = sld [smem:[#allocation3 + %s167]]
    %s169 = scalar_lea.vmem [#allocation4], %s168
    %v170 = vld [vmem:[%s169] sm:$0x1]
    %s171 = sadd.s32 %s30, 19
    %s172 = sld [smem:[#allocation3 + %s171]]
    %s173 = scalar_lea.vmem [#allocation4], %s172
    %v174 = vld [vmem:[%s173] sm:$0x1]
    %s175 = sadd.s32 %s30, 20
    %s176 = sld [smem:[#allocation3 + %s175]]
    %s177 = scalar_lea.vmem [#allocation4], %s176
    %v178 = vld [vmem:[%s177] sm:$0x1]
    %s179 = sadd.s32 %s30, 21
    %s180 = sld [smem:[#allocation3 + %s179]]
    %s181 = scalar_lea.vmem [#allocation4], %s180
    %v182 = vld [vmem:[%s181] sm:$0x1]
    %s183 = sadd.s32 %s30, 22
    %s184 = sld [smem:[#allocation3 + %s183]]
    %s185 = scalar_lea.vmem [#allocation4], %s184
    %v186 = vld [vmem:[%s185] sm:$0x1]
    %s187 = sadd.s32 %s30, 23
    %s188 = sld [smem:[#allocation3 + %s187]]
    %s189 = scalar_lea.vmem [#allocation4], %s188
    %v190 = vld [vmem:[%s189] sm:$0x1]
    %v192 = vrot.slane %v166, 7
    %v195 = vrot.slane %v170, 6
    %v198 = vrot.slane %v174, 5
    %v201 = vrot.slane %v178, 4
    %v204 = vrot.slane %v182, 3
    %v207 = vrot.slane %v186, 2
    %v210 = vrot.slane %v190, 1
    %v212 = vsel %vm83, %v162, %v192
    %v213 = vsel %vm85, %v212, %v195
    %v214 = vsel %vm87, %v213, %v198
    %v215 = vsel %vm89, %v214, %v201
    %v216 = vsel %vm91, %v215, %v204
    %v217 = vsel %vm93, %v216, %v207
    %v218 = vsel %vm95, %v217, %v210
    %219 = vst [vmem:[#allocation7 + $0x10] sm:$0xff] %v218
    %s220 = sadd.s32 %s30, 24
    %s221 = sld [smem:[#allocation3 + %s220]]
    %s222 = scalar_lea.vmem [#allocation4], %s221
    %v223 = vld [vmem:[%s222] sm:$0x1]
    %s224 = sadd.s32 %s30, 25
    %s225 = sld [smem:[#allocation3 + %s224]]
    %s226 = scalar_lea.vmem [#allocation4], %s225
    %v227 = vld [vmem:[%s226] sm:$0x1]
    %s228 = sadd.s32 %s30, 26
    %s229 = sld [smem:[#allocation3 + %s228]]
    %s230 = scalar_lea.vmem [#allocation4], %s229
    %v231 = vld [vmem:[%s230] sm:$0x1]
    %s232 = sadd.s32 %s30, 27
    %s233 = sld [smem:[#allocation3 + %s232]]
    %s234 = scalar_lea.vmem [#allocation4], %s233
    %v235 = vld [vmem:[%s234] sm:$0x1]
    %s236 = sadd.s32 %s30, 28
    %s237 = sld [smem:[#allocation3 + %s236]]
    %s238 = scalar_lea.vmem [#allocation4], %s237
    %v239 = vld [vmem:[%s238] sm:$0x1]
    %s240 = sadd.s32 %s30, 29
    %s241 = sld [smem:[#allocation3 + %s240]]
    %s242 = scalar_lea.vmem [#allocation4], %s241
    %v243 = vld [vmem:[%s242] sm:$0x1]
    %s244 = sadd.s32 %s30, 30
    %s245 = sld [smem:[#allocation3 + %s244]]
    %s246 = scalar_lea.vmem [#allocation4], %s245
    %v247 = vld [vmem:[%s246] sm:$0x1]
    %s248 = sadd.s32 %s30, 31
    %s249 = sld [smem:[#allocation3 + %s248]]
    %s250 = scalar_lea.vmem [#allocation4], %s249
    %v251 = vld [vmem:[%s250] sm:$0x1]
    %v253 = vrot.slane %v227, 7
    %v256 = vrot.slane %v231, 6
    %v259 = vrot.slane %v235, 5
    %v262 = vrot.slane %v239, 4
    %v265 = vrot.slane %v243, 3
    %v268 = vrot.slane %v247, 2
    %v271 = vrot.slane %v251, 1
    %v273 = vsel %vm83, %v223, %v253
    %v274 = vsel %vm85, %v273, %v256
    %v275 = vsel %vm87, %v274, %v259
    %v276 = vsel %vm89, %v275, %v262
    %v277 = vsel %vm91, %v276, %v265
    %v278 = vsel %vm93, %v277, %v268
    %v279 = vsel %vm95, %v278, %v271
    %280 = vst [vmem:[#allocation7 + $0x18] sm:$0xff] %v279
    // Predicated region
    $region10: #{positional_embedding.1} parent=1 // pred_check
      _
    $region11: #{positional_embedding.1} parent=1 // pred_check_branch
      %282 = sbr.rel (0) target = $region13
    $region12: #{positional_embedding.1} parent=1 // pred_region
      %s284 = ssub.s32 512, 512
      %285 = vsyncadd [#allocation6], %s284
      %s286 = sshll.u32 [#allocation7], 4
      %s287 = int_to_ptr.vmem [resolvable:$true] %s286
      %292 = dma.vmem_to_hbm [thread:$0]  %s287, 512, %s2, [#allocation6], 128, 128, 8
    $region13: #{positional_embedding.1} parent=1 // pred_fallthru
      _
    // Predicated region
    $region14: #{positional_embedding.1} parent=1 // pred_check
      _
    $region15: #{positional_embedding.1} parent=1 // pred_check_branch
      %294 = sbr.rel (0) target = $region17
    $region16: #{positional_embedding.1} parent=1 // pred_region
      %295 = dma.done [#allocation6], 512
    $region17: #{positional_embedding.1} parent=1 // pred_fallthru
      _
    %296 = vsyncpa [#allocation5], 1
    %297 = vsyncpa [#allocation6], 1

</llo_original>
